<compile_context>
chip_gen: v7x
topology: tpu7x:2x2x1
jax: 0.10.0
libtpu: 0.0.40
codegen_flags: <defaults>
</compile_context>

<pallas_src>
import functools

import jax
import jax.numpy as jnp
from jax.experimental import pallas as pl
from jax.experimental.pallas import tpu as pltpu

SUBLANE = 8
WEIGHT_DTYPE = jnp.bfloat16     # halves resident weight footprint & HBM weight reads


# ----------------------------------------------------------------------------
# Generation-aware VMEM budgeting
# ----------------------------------------------------------------------------
def _tpu_vmem_capacity_bytes():
    try:
        info = pltpu.get_tpu_info()
        for name in ("vmem_capacity_bytes", "vmem_size_bytes", "vmem_bytes"):
            cap = getattr(info, name, None)
            if cap:
                return int(cap)
    except Exception:
        pass
    return 64 << 20   # conservative default: v7x-class part (smallest VMEM)


def _vmem_limit_bytes():
    cap = _tpu_vmem_capacity_bytes()
    # ~48 MiB on a 64 MiB (v7x) part, up to ~110 MiB on 128 MiB (v5e/v6e) parts.
    return int(min(max(cap - (16 << 20), 16 << 20), 110 << 20))


def _row_tile_budget_bytes():
    cap = _tpu_vmem_capacity_bytes()
    return int(min(max(cap // 6, 8 << 20), 24 << 20))


def _compiler_params(dimension_semantics, vmem_limit):
    return pltpu.CompilerParams(
        dimension_semantics=dimension_semantics,
        vmem_limit_bytes=int(vmem_limit),
    )


def _choose_row_tile(n_rows, per_row_f32_elems, budget_bytes):
    """Largest row tile fitting the VMEM budget.

    Returns either the full row count (single block == full array dim, always
    legal) or a multiple-of-8 tile; the ragged last tile is masked by Pallas,
    so the wrapper never pads the row dimension.
    """
    cap = budget_bytes // max(1, per_row_f32_elems * 4)
    cap = max(SUBLANE, min(int(cap) // SUBLANE * SUBLANE, 4096))
    if n_rows <= cap:
        return max(int(n_rows), 1)
    return int(cap)


def _choose_q_tile(seq_len, budget_bytes=6 << 20):
    """Bound the (tq, S) f32 score materialization.
    TODO(synk): flash-style online softmax for very long sequences."""
    if seq_len <= 512:
        return int(seq_len)
    tq = (budget_bytes // (4 * seq_len)) // SUBLANE * SUBLANE
    return int(max(SUBLANE, min(tq, 512)))


# ----------------------------------------------------------------------------
# Resident (single-buffered) weight specs, with graceful fallback
# ----------------------------------------------------------------------------
_SINGLE_BUFFER_OK = [True]   # flipped off if this build rejects pl.Buffered(1)


def _resident_spec(block_shape, index_map, single_buffer):
    """Constant-index operand kept resident in VMEM.  Requested single-buffered
    so the default double-buffering does not duplicate the weight footprint."""
    if single_buffer:
        return pl.BlockSpec(block_shape, index_map, pipeline_mode=pl.Buffered(1))
    return pl.BlockSpec(block_shape, index_map)


def _call_with_resident_fallback(make, *args):
    if _SINGLE_BUFFER_OK[0]:
        try:
            return make(True)(*args)
        except Exception:
            _SINGLE_BUFFER_OK[0] = False
    return make(False)(*args)


# ----------------------------------------------------------------------------
# Kernels
# ----------------------------------------------------------------------------
def _linear_kernel(x_ref, w_ref, b_ref, o_ref, *, apply_relu):
    """y = x @ W + b (+ optional ReLU).  bf16 MXU inputs, f32 accumulation."""
    x = x_ref[...].astype(w_ref.dtype)
    y = jnp.dot(x, w_ref[...], preferred_element_type=jnp.float32) + b_ref[...]
    if apply_relu:
        y = jnp.maximum(y, 0.0)
    o_ref[...] = y.astype(o_ref.dtype)


def _mlp_kernel(x_ref, w1_ref, b1_ref, w2_ref, b2_ref, o_ref):
    """y = relu(x @ W1 + b1) @ W2 + b2; hidden stays in vregs (no VMEM round-trip)."""
    x = x_ref[...].astype(w1_ref.dtype)
    h = jnp.dot(x, w1_ref[...], preferred_element_type=jnp.float32) + b1_ref[...]
    h = jnp.maximum(h, 0.0).astype(w2_ref.dtype)     # bf16 hidden halves vreg pressure
    y = jnp.dot(h, w2_ref[...], preferred_element_type=jnp.float32) + b2_ref[...]
    o_ref[...] = y.astype(o_ref.dtype)


def _attention_kernel(xq_ref, xkv_ref, wq_ref, bq_ref, wkv_ref, bkv_ref, o_ref,
                      *, scale, dqk):
    """softmax(Q K^T * scale) V for one (batch, q-tile) grid point.

    Q is projected from the q-row tile only; K and V come from a single fused
    (din, dqk + dout) matmul over the full-sequence block.
    """
    cd = wq_ref.dtype
    xq = xq_ref[0].astype(cd)                                    # (tq, din)
    xkv = xkv_ref[0].astype(cd)                                  # (S,  din)
    q = jnp.dot(xq, wq_ref[...], preferred_element_type=jnp.float32) + bq_ref[...]
    kv = jnp.dot(xkv, wkv_ref[...], preferred_element_type=jnp.float32) + bkv_ref[...]
    k = kv[:, :dqk]
    v = kv[:, dqk:]
    # scores: q @ k^T without an explicit transpose (contract last dims)
    s = jax.lax.dot_general(q, k, (((1,), (1,)), ((), ())),
                            preferred_element_type=jnp.float32) * scale   # (tq, S)
    s_max = jnp.max(s, axis=-1, keepdims=True)
    p = jnp.exp(s - s_max)
    p = p * pl.reciprocal(jnp.sum(p, axis=-1, keepdims=True), approx=True)  # EUP slot
    o_ref[0] = jnp.dot(p, v, preferred_element_type=jnp.float32).astype(o_ref.dtype)


# ----------------------------------------------------------------------------
# pallas_call wrappers
# ----------------------------------------------------------------------------
def _call_linear(x2d, w, b, apply_relu, tn, vmem_limit):
    n, din = x2d.shape
    dout = w.shape[1]
    cost = pl.CostEstimate(
        flops=int(2 * n * din * dout),
        transcendentals=0,
        bytes_accessed=int(x2d.size * x2d.dtype.itemsize + w.size * w.dtype.itemsize
                           + b.size * b.dtype.itemsize + n * dout * x2d.dtype.itemsize))

    def make(single_buffer):
        return pl.pallas_call(
            functools.partial(_linear_kernel, apply_relu=apply_relu),
            out_shape=jax.ShapeDtypeStruct((n, dout), x2d.dtype),
            grid=(pl.cdiv(n, tn),),
            in_specs=[
                pl.BlockSpec((tn, din), lambda i: (i, 0)),                 # streamed rows
                _resident_spec((din, dout), lambda i: (0, 0), single_buffer),
                _resident_spec((1, dout), lambda i: (0, 0), single_buffer),
            ],
            out_specs=pl.BlockSpec((tn, dout), lambda i: (i, 0)),
            compiler_params=_compiler_params(("parallel",), vmem_limit),
            cost_estimate=cost,
        )

    return _call_with_resident_fallback(make, x2d, w, b)


def _call_mlp(x2d, w1, b1, w2, b2, tn, vmem_limit):
    n, din = x2d.shape
    hid = w1.shape[1]
    dout = w2.shape[1]
    cost = pl.CostEstimate(
        flops=int(2 * n * din * hid + 2 * n * hid * dout),
        transcendentals=0,
        bytes_accessed=int(x2d.size * x2d.dtype.itemsize
                           + (w1.size + w2.size) * w1.dtype.itemsize
                           + (b1.size + b2.size) * b1.dtype.itemsize
                           + n * dout * x2d.dtype.itemsize))

    def make(single_buffer):
        return pl.pallas_call(
            _mlp_kernel,
            out_shape=jax.ShapeDtypeStruct((n, dout), x2d.dtype),
            grid=(pl.cdiv(n, tn),),
            in_specs=[
                pl.BlockSpec((tn, din), lambda i: (i, 0)),
                _resident_spec((din, hid), lambda i: (0, 0), single_buffer),
                _resident_spec((1, hid), lambda i: (0, 0), single_buffer),
                _resident_spec((hid, dout), lambda i: (0, 0), single_buffer),
                _resident_spec((1, dout), lambda i: (0, 0), single_buffer),
            ],
            out_specs=pl.BlockSpec((tn, dout), lambda i: (i, 0)),
            compiler_params=_compiler_params(("parallel",), vmem_limit),
            cost_estimate=cost,
        )

    return _call_with_resident_fallback(make, x2d, w1, b1, w2, b2)


def _call_attention(x3d, wq, bq, wkv, bkv, scale, dqk, tq, vmem_limit):
    B, S, din = x3d.shape
    dout = wkv.shape[1] - dqk
    n_qt = pl.cdiv(S, tq)
    cost = pl.CostEstimate(
        flops=int(2 * B * S * din * dqk
                  + 2 * B * n_qt * S * din * (dqk + dout)
                  + 2 * B * S * S * dqk + 2 * B * S * S * dout),
        transcendentals=int(B * S * S),
        bytes_accessed=int(2 * x3d.size * x3d.dtype.itemsize
                           + (wq.size + wkv.size) * wq.dtype.itemsize
                           + (bq.size + bkv.size) * bq.dtype.itemsize
                           + B * S * dout * x3d.dtype.itemsize))

    def make(single_buffer):
        return pl.pallas_call(
            functools.partial(_attention_kernel, scale=scale, dqk=dqk),
            out_shape=jax.ShapeDtypeStruct((B, S, dout), x3d.dtype),
            grid=(B, n_qt),
            in_specs=[
                pl.BlockSpec((1, tq, din), lambda b, q: (b, q, 0)),   # q-row tile
                pl.BlockSpec((1, S, din), lambda b, q: (b, 0, 0)),    # full seq for K/V
                _resident_spec((din, dqk), lambda b, q: (0, 0), single_buffer),
                _resident_spec((1, dqk), lambda b, q: (0, 0), single_buffer),
                _resident_spec((din, dqk + dout), lambda b, q: (0, 0), single_buffer),
                _resident_spec((1, dqk + dout), lambda b, q: (0, 0), single_buffer),
            ],
            out_specs=pl.BlockSpec((1, tq, dout), lambda b, q: (b, q, 0)),
            compiler_params=_compiler_params(("parallel", "parallel"), vmem_limit),
            cost_estimate=cost,
        )

    # x is passed twice (q-tile view and full-sequence view for K/V).
    return _call_with_resident_fallback(make, x3d, x3d, wq, bq, wkv, bkv)


# ----------------------------------------------------------------------------
# AdapterLayer (JAX/Pallas port)
# ----------------------------------------------------------------------------
def _init_linear_params(key, in_dim, out_dim, w_dtype=WEIGHT_DTYPE):
    """nn.Linear-style init U(-1/sqrt(in), 1/sqrt(in)); W stored [in, out] bf16, bias f32."""
    kw, kb = jax.random.split(key)
    bound = 1.0 / float(in_dim) ** 0.5
    w = jax.random.uniform(kw, (in_dim, out_dim), jnp.float32, -bound, bound)
    b = jax.random.uniform(kb, (1, out_dim), jnp.float32, -bound, bound)
    return w.astype(w_dtype), b


class AdapterLayerPallas:
    def __init__(self, input_dim, output_dim, adapter_type='linear',
                 preserve_batch=True, dropout=0.1, key=None):
        if key is None:
            key = jax.random.PRNGKey(0)
        self.input_dim = input_dim
        self.output_dim = output_dim
        self.adapter_type = adapter_type
        self.preserve_batch = preserve_batch
        self.dropout = dropout            # identity in eval mode (see TODO at top)
        self.two_layer = False
        self.hidden_dim = 0

        self._vmem_limit = _vmem_limit_bytes()
        self._tile_budget = _row_tile_budget_bytes()

        if adapter_type == 'linear':
            self.w, self.b = _init_linear_params(key, input_dim, output_dim)
            self.apply_relu = (input_dim != output_dim)
        elif adapter_type == 'projection':
            if input_dim > output_dim:
                hid = (input_dim + output_dim) // 2
                self.hidden_dim = hid
                self.two_layer = True
                k1, k2 = jax.random.split(key)
                self.w1, self.b1 = _init_linear_params(k1, input_dim, hid)
                self.w2, self.b2 = _init_linear_params(k2, hid, output_dim)
            else:
                self.w, self.b = _init_linear_params(key, input_dim, output_dim)
                self.apply_relu = (input_dim != output_dim)
        elif adapter_type == 'attention':
            dqk = min(input_dim, output_dim)
            self.dqk = dqk
            kq, kk, kv = jax.random.split(key, 3)
            self.wq, self.bq = _init_linear_params(kq, input_dim, dqk)
            wk, bk = _init_linear_params(kk, input_dim, dqk)
            wv, bv = _init_linear_params(kv, input_dim, output_dim)
            # Fused K/V projection: one wide matmul instead of two narrow ones.
            self.wkv = jnp.concatenate([wk, wv], axis=1)
            self.bkv = jnp.concatenate([bk, bv], axis=1)
            self.scale = float(1.0 / (dqk ** 0.5))
        else:
            raise ValueError(f'Unknown adapter type: {adapter_type}')

    # ------------------------------------------------------------------
    def __call__(self, x):
        if self.adapter_type == 'attention':
            return self._attention_forward(x)
        return self._standard_forward(x)

    def _standard_forward(self, x):
        orig_shape = x.shape
        # flatten all leading dims (mirrors the .view(-1, input_dim) in PyTorch);
        # reshapes here are layout no-ops (no HBM pass).
        x2d = x.reshape(-1, orig_shape[-1]) if x.ndim != 2 else x
        n = x2d.shape[0]

        per_row = 2 * (self.input_dim + self.output_dim) + 2 * self.hidden_dim
        tn = _choose_row_tile(n, per_row, self._tile_budget)

        if self.two_layer:
            y2d = _call_mlp(x2d, self.w1, self.b1, self.w2, self.b2,
                            tn, self._vmem_limit)
        else:
            y2d = _call_linear(x2d, self.w, self.b, self.apply_relu,
                               tn, self._vmem_limit)

        return y2d.reshape(*orig_shape[:-1], self.output_dim)

    def _attention_forward(self, x):
        # Support 2-D [S, D] (batch of 1) and 3-D [B, S, D] inputs.
        squeeze = (x.ndim == 2)
        x3d = x[None] if squeeze else x
        _, S, _ = x3d.shape
        tq = _choose_q_tile(S)
        y = _call_attention(x3d, self.wq, self.bq, self.wkv, self.bkv,
                            self.scale, self.dqk, tq, self._vmem_limit)
        return y[0] if squeeze else y


# ----------------------------------------------------------------------------
# Pure-JAX references (mirror the kernel's bf16 rounding for tight checks)
# ----------------------------------------------------------------------------
def _bf16_round(x):
    return x.astype(jnp.bfloat16).astype(jnp.float32)


def _ref_linear(x, w, b, relu):
    x2 = _bf16_round(x.reshape(-1, x.shape[-1]))
    y = x2 @ w.astype(jnp.float32) + b
    if relu:
        y = jnp.maximum(y, 0.0)
    return y.reshape(*x.shape[:-1], w.shape[1])


def _ref_mlp(x, w1, b1, w2, b2):
    x2 = _bf16_round(x.reshape(-1, x.shape[-1]))
    h = jnp.maximum(x2 @ w1.astype(jnp.float32) + b1, 0.0)
    y = _bf16_round(h) @ w2.astype(jnp.float32) + b2
    return y.reshape(*x.shape[:-1], w2.shape[1])


def _ref_attention(x, wq, bq, wkv, bkv, dqk, scale):
    xb = _bf16_round(x)
    q = jnp.einsum('bsd,de->bse', xb, wq.astype(jnp.float32)) + bq
    kv = jnp.einsum('bsd,de->bse', xb, wkv.astype(jnp.float32)) + bkv
    k, v = kv[..., :dqk], kv[..., dqk:]
    s = jnp.einsum('bqd,bkd->bqk', q, k) * scale
    p = jax.nn.softmax(s, axis=-1)
    return jnp.einsum('bqk,bko->bqo', p, v)


# ----------------------------------------------------------------------------
# Demo / smoke test
# ----------------------------------------------------------------------------
if __name__ == "__main__":
    key = jax.random.PRNGKey(0)
    kx, kp1, kp2, kp3 = jax.random.split(key, 4)

    batch, seq, input_dim, output_dim = 2, 8, 32, 16
    x = jax.random.normal(kx, (batch, seq, input_dim), jnp.float32)

    # linear adapter (Linear + ReLU since dims differ; dropout = identity in eval)
    linear_adapter = AdapterLayerPallas(input_dim, output_dim,
                                        adapter_type='linear', key=kp1)
    # projection adapter (input_dim > output_dim -> two-layer MLP)
    proj_adapter = AdapterLayerPallas(input_dim, output_dim,
                                      adapter_type='projection', key=kp2)
    # attention adapter
    attn_adapter = AdapterLayerPallas(input_dim, output_dim,
                                      adapter_type='attention', key=kp3)

    y_lin = linear_adapter(x)
    y_proj = proj_adapter(x)
    y_attn = attn_adapter(x)
    jax.block_until_ready((y_lin, y_proj, y_attn))

    assert y_lin.shape == (batch, seq, output_dim)
    assert y_proj.shape == (batch, seq, output_dim)
    assert y_attn.shape == (batch, seq, output_dim)

    # numeric checks against pure-JAX references
    r_lin = _ref_linear(x, linear_adapter.w, linear_adapter.b, linear_adapter.apply_relu)
    r_proj = _ref_mlp(x, proj_adapter.w1, proj_adapter.b1,
                      proj_adapter.w2, proj_adapter.b2)
    r_attn = _ref_attention(x, attn_adapter.wq, attn_adapter.bq,
                            attn_adapter.wkv, attn_adapter.bkv,
                            attn_adapter.dqk, attn_adapter.scale)

    assert bool(jnp.allclose(y_lin, r_lin, rtol=2e-3, atol=2e-3))
    assert bool(jnp.allclose(y_proj, r_proj, rtol=2e-3, atol=2e-3))
    # approx reciprocal in softmax -> slightly looser tolerance
    assert bool(jnp.allclose(y_attn, r_attn, rtol=5e-3, atol=5e-3))

    print("KERNEL_OK")
</pallas_src>

<mosaic_0001>
module attributes {stable_mosaic.version = 11 : i64} {
  func.func @_linear_kernel(%arg0: i32, %arg1: memref<16x32xf32, #tpu.memory_space<vmem>>, %arg2: memref<32x16xbf16, #tpu.memory_space<vmem>>, %arg3: memref<1x16xf32, #tpu.memory_space<vmem>>, %arg4: memref<16x16xf32, #tpu.memory_space<vmem>>) attributes {dimension_semantics = [#tpu.dimension_semantics<parallel>], iteration_bounds = array<i64: 1>, scalar_prefetch = 0 : i64, scratch_operands = 0 : i64, tpu.core_type = #tpu.core_type<tc>, window_params = [{transform_indices = @transform_0, window_bounds = array<i64: 16, 32>}, {pipeline_mode = #tpu.pipeline_mode<synchronous>, transform_indices = @transform_1, window_bounds = array<i64: 32, 16>}, {pipeline_mode = #tpu.pipeline_mode<synchronous>, transform_indices = @transform_2, window_bounds = array<i64: 1, 16>}, {transform_indices = @transform_3, window_bounds = array<i64: 16, 16>}]} {
    %c0 = arith.constant 0 : index
    %c0_0 = arith.constant 0 : index
    %0 = vector.load %arg1[%c0, %c0_0] : memref<16x32xf32, #tpu.memory_space<vmem>>, vector<16x32xf32>
    %1 = arith.truncf %0 : vector<16x32xf32> to vector<16x32xbf16>
    %c0_1 = arith.constant 0 : index
    %c0_2 = arith.constant 0 : index
    %2 = vector.load %arg2[%c0_1, %c0_2] : memref<32x16xbf16, #tpu.memory_space<vmem>>, vector<32x16xbf16>
    %cst = arith.constant dense<0.000000e+00> : vector<16x16xf32>
    %3 = tpu.matmul %1, %2, %cst {dimension_numbers = #tpu.dot_dimension_numbers<[1], [0], [0], [1], [0, 0, 1, 1], [], []>} : vector<16x32xbf16>, vector<32x16xbf16>, vector<16x16xf32> -> vector<16x16xf32>
    %c0_3 = arith.constant 0 : index
    %c0_4 = arith.constant 0 : index
    %4 = vector.load %arg3[%c0_3, %c0_4] : memref<1x16xf32, #tpu.memory_space<vmem>>, vector<1x16xf32>
    %5 = vector.broadcast %4 : vector<1x16xf32> to vector<16x16xf32>
    %6 = arith.addf %3, %5 : vector<16x16xf32>
    %cst_5 = arith.constant 0.000000e+00 : f32
    %7 = vector.broadcast %cst_5 : f32 to vector<16x16xf32>
    %8 = arith.maximumf %6, %7 : vector<16x16xf32>
    %c0_6 = arith.constant 0 : index
    %c0_7 = arith.constant 0 : index
    %9 = vector.load %arg4[%c0_6, %c0_7] : memref<16x16xf32, #tpu.memory_space<vmem>>, vector<16x16xf32>
    tpu.vector_store %arg4[%c0_6, %c0_7], %8 {strides = array<i32>} : memref<16x16xf32, #tpu.memory_space<vmem>>, vector<16x16xf32>,
    return
  }
  func.func @transform_0(%arg0: i32) -> (i32, i32) {
    %c0_i32 = arith.constant 0 : i32
    %c0_i32_0 = arith.constant 0 : i32
    return %arg0, %c0_i32 : i32, i32
  }
  func.func @transform_1(%arg0: i32) -> (i32, i32) {
    %c0_i32 = arith.constant 0 : i32
    %c0_i32_0 = arith.constant 0 : i32
    %c0_i32_1 = arith.constant 0 : i32
    return %c0_i32, %c0_i32_0 : i32, i32
  }
  func.func @transform_2(%arg0: i32) -> (i32, i32) {
    %c0_i32 = arith.constant 0 : i32
    %c0_i32_0 = arith.constant 0 : i32
    %c0_i32_1 = arith.constant 0 : i32
    return %c0_i32, %c0_i32_0 : i32, i32
  }
  func.func @transform_3(%arg0: i32) -> (i32, i32) {
    %c0_i32 = arith.constant 0 : i32
    %c0_i32_0 = arith.constant 0 : i32
    return %arg0, %c0_i32 : i32, i32
  }
}

module attributes {stable_mosaic.version = 11 : i64} {
  func.func @_linear_kernel(%arg0: i32, %arg1: memref<16x32xf32, #tpu.memory_space<vmem>>, %arg2: memref<32x16xbf16, #tpu.memory_space<vmem>>, %arg3: memref<1x16xf32, #tpu.memory_space<vmem>>, %arg4: memref<16x16xf32, #tpu.memory_space<vmem>>) attributes {dimension_semantics = [#tpu.dimension_semantics<parallel>], iteration_bounds = array<i64: 1>, scalar_prefetch = 0 : i64, scratch_operands = 0 : i64, tpu.core_type = #tpu.core_type<tc>, window_params = [{transform_indices = @transform_0, window_bounds = array<i64: 16, 32>}, {pipeline_mode = #tpu.pipeline_mode<synchronous>, transform_indices = @transform_1, window_bounds = array<i64: 32, 16>}, {pipeline_mode = #tpu.pipeline_mode<synchronous>, transform_indices = @transform_2, window_bounds = array<i64: 1, 16>}, {transform_indices = @transform_3, window_bounds = array<i64: 16, 16>}]} {
    %c0 = arith.constant 0 : index
    %c0_0 = arith.constant 0 : index
    %0 = vector.load %arg1[%c0, %c0_0] : memref<16x32xf32, #tpu.memory_space<vmem>>, vector<16x32xf32>
    %1 = arith.truncf %0 : vector<16x32xf32> to vector<16x32xbf16>
    %c0_1 = arith.constant 0 : index
    %c0_2 = arith.constant 0 : index
    %2 = vector.load %arg2[%c0_1, %c0_2] : memref<32x16xbf16, #tpu.memory_space<vmem>>, vector<32x16xbf16>
    %cst = arith.constant dense<0.000000e+00> : vector<16x16xf32>
    %3 = tpu.matmul %1, %2, %cst {dimension_numbers = #tpu.dot_dimension_numbers<[1], [0], [0], [1], [0, 0, 1, 1], [], []>} : vector<16x32xbf16>, vector<32x16xbf16>, vector<16x16xf32> -> vector<16x16xf32>
    %c0_3 = arith.constant 0 : index
    %c0_4 = arith.constant 0 : index
    %4 = vector.load %arg3[%c0_3, %c0_4] : memref<1x16xf32, #tpu.memory_space<vmem>>, vector<1x16xf32>
    %5 = vector.broadcast %4 : vector<1x16xf32> to vector<16x16xf32>
    %6 = arith.addf %3, %5 : vector<16x16xf32>
    %cst_5 = arith.constant 0.000000e+00 : f32
    %7 = vector.broadcast %cst_5 : f32 to vector<16x16xf32>
    %8 = arith.maximumf %6, %7 : vector<16x16xf32>
    %c0_6 = arith.constant 0 : index
    %c0_7 = arith.constant 0 : index
    %9 = vector.load %arg4[%c0_6, %c0_7] : memref<16x16xf32, #tpu.memory_space<vmem>>, vector<16x16xf32>
    tpu.vector_store %arg4[%c0_6, %c0_7], %8 {strides = array<i32>} : memref<16x16xf32, #tpu.memory_space<vmem>>, vector<16x16xf32>,
    return
  }
  func.func @transform_0(%arg0: i32) -> (i32, i32) {
    %c0_i32 = arith.constant 0 : i32
    %c0_i32_0 = arith.constant 0 : i32
    return %arg0, %c0_i32 : i32, i32
  }
  func.func @transform_1(%arg0: i32) -> (i32, i32) {
    %c0_i32 = arith.constant 0 : i32
    %c0_i32_0 = arith.constant 0 : i32
    %c0_i32_1 = arith.constant 0 : i32
    return %c0_i32, %c0_i32_0 : i32, i32
  }
  func.func @transform_2(%arg0: i32) -> (i32, i32) {
    %c0_i32 = arith.constant 0 : i32
    %c0_i32_0 = arith.constant 0 : i32
    %c0_i32_1 = arith.constant 0 : i32
    return %c0_i32, %c0_i32_0 : i32, i32
  }
  func.func @transform_3(%arg0: i32) -> (i32, i32) {
    %c0_i32 = arith.constant 0 : i32
    %c0_i32_0 = arith.constant 0 : i32
    return %arg0, %c0_i32 : i32, i32
  }
}

</mosaic_0001>

<llo_original>
// kernel: tpu_custom_call.1
$region0: #{tpu_custom_call.1}
  #allocation0 [shape = 'u32[]', space=smem, size = 0x4, offset = 0x4, fixed_abs, tag = 'smem constant byte address 0x4 - core index']
  #allocation1 [shape = 'u32[144,128]{1,0:T(1,128)}', space=vmem, size = 0x12000, scoped, tag = 'internal scratch']
  %s0 = inlined_call_operand.vmem [shape: f32[16,32], index: 0, kind: input, shape index: {}]
  %s1 = inlined_call_operand.vmem [shape: bf16[32,16], index: 1, kind: input, shape index: {}]
  %s2 = inlined_call_operand.vmem [shape: f32[1,16], index: 2, kind: input, shape index: {}]
  %s3 = inlined_call_operand.hbm [shape: f32[16,16], index: 3, kind: output, shape index: {}]
  %s4 = sld [smem:[#allocation0]]
  $region22: #{tpu_custom_call.1} parent=0
    _
  %s6 = ssub.s32 1, %s4
  %s7 = scalar_select 0, %s6, %s4
  $region1: #{tpu_custom_call.1} parent=0
    #allocation2 [shape = 'u8[8192]{0}', space=vmem, size = 0x2000, scoped, tag = 'output window, operand 0, single buffered']
    #allocation3 [shape = 's32[1]{0}', space=sflag, size = 0x4, scoped, tag = 'scoped memory for tpu_custom_call.1']
    %8 = vsyncpa [#allocation3], 0
    // Predicated region
    $region2: #{tpu_custom_call.1} parent=1 // pred_check
      _
    $region3: #{tpu_custom_call.1} parent=1 // pred_check_branch
      %10 = sbr.rel (0) target = $region5
    $region4: #{tpu_custom_call.1} parent=1 // pred_region
      _
    $region5: #{tpu_custom_call.1} parent=1 // pred_fallthru
      _
    // Predicated region
    $region6: #{tpu_custom_call.1} parent=1 // pred_check
      _
    $region7: #{tpu_custom_call.1} parent=1 // pred_check_branch
      %12 = sbr.rel (0) target = $region9
    $region8: #{tpu_custom_call.1} parent=1 // pred_region
      _
    $region9: #{tpu_custom_call.1} parent=1 // pred_fallthru
      _
    // Predicated region
    $region10: #{tpu_custom_call.1} parent=1 // pred_check
      _
    $region11: #{tpu_custom_call.1} parent=1 // pred_check_branch
      %14 = sbr.rel (0) target = $region13
    $region12: #{tpu_custom_call.1} parent=1 // pred_region
      _
    $region13: #{tpu_custom_call.1} parent=1 // pred_fallthru
      _
    %v16 = vld [vmem:[%s0] sm:$0xff]
    %v17 = vld [vmem:[%s0 + $0x8] sm:$0xff]
    %v18 = vpack.c.bf16 %v17, %v16
    %v19 = vld [vmem:[%s1] sm:$0xf]
    %v20 = vld [vmem:[%s1 + $0x4] sm:$0xf]
    %v21 = vld [vmem:[%s1 + $0x8] sm:$0xf]
    %v22 = vld [vmem:[%s1 + $0xc] sm:$0xf]
    %v23 = vld [vmem:[%s2] sm:$0x1]
    %v25 = vlaneseq
    %v26 = vshrl.u32 %v25, 7
    %v27 = vsub.s32 0, %v26
    %v28 = vrot.slane %v23, %v27
    %v34 = vunpack.c.l.b16 %v19
    %v35 = vunpack.c.l.b16 %v20
    %v36 = vunpack.c.l.b16 %v21
    %v37 = vunpack.c.l.b16 %v22
    %v38 = vpack.c.b16 %v35, %v34
    %v39 = vpack.c.b16 %v37, %v36
    %vm42 = vcmask 261120
    %v44 = vsel %vm42, %v18, 0
    %46 = vmatprep.subr.bf16.mxu0 0
    %47 = vmatpush1.bf16.msra.mxu0 %v38
    %48 = vmatprep.subr.bf16.mxu0 0
    %49 = vmatpush1.bf16.msra.mxu0 %v39
    %50 = vmatprep.subr.bf16.mxu0 0
    %51 = vmatpush1.bf16.msra.mxu0 0
    %52 = vmatprep.subr.bf16.mxu0 0
    %53 = vmatpush1.bf16.msra.mxu0 0
    %54 = vmatprep.subr.bf16.mxu0 0
    %55 = vmatpush1.bf16.msra.mxu0 0
    %56 = vmatprep.subr.bf16.mxu0 0
    %57 = vmatpush1.bf16.msra.mxu0 0
    %58 = vmatprep.subr.bf16.mxu0 0
    %59 = vmatpush1.bf16.msra.mxu0 0
    %60 = vmatprep.subr.bf16.mxu0 0
    %61 = vmatpush1.bf16.msra.mxu0 0
    %62 = vmatprep.subr.bf16.mxu0 0
    %63 = vmatpush1.bf16.msra.mxu0 0
    %64 = vmatprep.subr.bf16.mxu0 0
    %65 = vmatpush1.bf16.msra.mxu0 0
    %66 = vmatprep.subr.bf16.mxu0 0
    %67 = vmatpush1.bf16.msra.mxu0 0
    %68 = vmatprep.subr.bf16.mxu0 0
    %69 = vmatpush1.bf16.msra.mxu0 0
    %70 = vmatprep.subr.bf16.mxu0 0
    %71 = vmatpush1.bf16.msra.mxu0 0
    %72 = vmatprep.subr.bf16.mxu0 0
    %73 = vmatpush1.bf16.msra.mxu0 0
    %74 = vmatprep.subr.bf16.mxu0 0
    %75 = vmatpush1.bf16.msra.mxu0 0
    %76 = vmatprep.subr.bf16.mxu0 0
    %77 = vmatpush1.bf16.msra.mxu0 0
    %78 = vmatprep.mubr.bf16.mxu0 0
    %79 = vmatmul.mubr.bf16.gmra.mrb[0].mxu0 %v44
    %v80 = vpop.f32.mrb[0].mxu0
    %v81 = vadd.f32 %v28, %v80
    %v82 = vpop.f32.mrb[0].mxu0
    %v83 = vpop.f32.mrb[0].mxu0
    %v84 = vadd.f32 %v28, %v83
    %v85 = vpop.f32.mrb[0].mxu0
    %86 = vdwg.mxu0
    %v87 = vmax.f32 %v81, 0.0
    %v88 = vmax.f32 %v84, 0.0
    %vm89 = vcmask 130048
    %90 = vst.msk [vmem:[#allocation2] sm:$0xff] %vm89, %v87
    %91 = vst.msk [vmem:[#allocation2 + $0x8] sm:$0xff] %vm89, %v88
    // Predicated region
    $region14: #{tpu_custom_call.1} parent=1 // pred_check
      _
    $region15: #{tpu_custom_call.1} parent=1 // pred_check_branch
      %93 = sbr.rel (0) target = $region17
    $region16: #{tpu_custom_call.1} parent=1 // pred_region
      %s95 = ssub.s32 256, 256
      %96 = vsyncadd [#allocation3], %s95
      %s97 = sshll.u32 [#allocation2], 4
      %s98 = int_to_ptr.vmem [resolvable:$true] %s97
      %103 = dma.vmem_to_hbm [thread:$0]  %s98, 256, %s3, [#allocation3], 128, 128, 8
    $region17: #{tpu_custom_call.1} parent=1 // pred_fallthru
      _
    // Predicated region
    $region18: #{tpu_custom_call.1} parent=1 // pred_check
      _
    $region19: #{tpu_custom_call.1} parent=1 // pred_check_branch
      %105 = sbr.rel (0) target = $region21
    $region20: #{tpu_custom_call.1} parent=1 // pred_region
      %106 = dma.done [#allocation3], 256
    $region21: #{tpu_custom_call.1} parent=1 // pred_fallthru
      _
    %107 = vsyncpa [#allocation3], 1

// kernel: tpu_custom_call.1
$region0: #{tpu_custom_call.1}
  #allocation0 [shape = 'u32[]', space=smem, size = 0x4, offset = 0x4, fixed_abs, tag = 'smem constant byte address 0x4 - core index']
  #allocation1 [shape = 'u32[144,128]{1,0:T(1,128)}', space=vmem, size = 0x12000, scoped, tag = 'internal scratch']
  %s0 = inlined_call_operand.vmem [shape: f32[16,32], index: 0, kind: input, shape index: {}]
  %s1 = inlined_call_operand.vmem [shape: bf16[32,16], index: 1, kind: input, shape index: {}]
  %s2 = inlined_call_operand.vmem [shape: f32[1,16], index: 2, kind: input, shape index: {}]
  %s3 = inlined_call_operand.hbm [shape: f32[16,16], index: 3, kind: output, shape index: {}]
  %s4 = sld [smem:[#allocation0]]
  $region22: #{tpu_custom_call.1} parent=0
    _
  %s6 = ssub.s32 1, %s4
  %s7 = scalar_select 0, %s6, %s4
  $region1: #{tpu_custom_call.1} parent=0
    #allocation2 [shape = 'u8[8192]{0}', space=vmem, size = 0x2000, scoped, tag = 'output window, operand 0, single buffered']
    #allocation3 [shape = 's32[1]{0}', space=sflag, size = 0x4, scoped, tag = 'scoped memory for tpu_custom_call.1']
    %8 = vsyncpa [#allocation3], 0
    // Predicated region
    $region2: #{tpu_custom_call.1} parent=1 // pred_check
      _
    $region3: #{tpu_custom_call.1} parent=1 // pred_check_branch
      %10 = sbr.rel (0) target = $region5
    $region4: #{tpu_custom_call.1} parent=1 // pred_region
      _
    $region5: #{tpu_custom_call.1} parent=1 // pred_fallthru
      _
    // Predicated region
    $region6: #{tpu_custom_call.1} parent=1 // pred_check
      _
    $region7: #{tpu_custom_call.1} parent=1 // pred_check_branch
      %12 = sbr.rel (0) target = $region9
    $region8: #{tpu_custom_call.1} parent=1 // pred_region
      _
    $region9: #{tpu_custom_call.1} parent=1 // pred_fallthru
      _
    // Predicated region
    $region10: #{tpu_custom_call.1} parent=1 // pred_check
      _
    $region11: #{tpu_custom_call.1} parent=1 // pred_check_branch
      %14 = sbr.rel (0) target = $region13
    $region12: #{tpu_custom_call.1} parent=1 // pred_region
      _
    $region13: #{tpu_custom_call.1} parent=1 // pred_fallthru
      _
    %v16 = vld [vmem:[%s0] sm:$0xff]
    %v17 = vld [vmem:[%s0 + $0x8] sm:$0xff]
    %v18 = vpack.c.bf16 %v17, %v16
    %v19 = vld [vmem:[%s1] sm:$0xf]
    %v20 = vld [vmem:[%s1 + $0x4] sm:$0xf]
    %v21 = vld [vmem:[%s1 + $0x8] sm:$0xf]
    %v22 = vld [vmem:[%s1 + $0xc] sm:$0xf]
    %v23 = vld [vmem:[%s2] sm:$0x1]
    %v25 = vlaneseq
    %v26 = vshrl.u32 %v25, 7
    %v27 = vsub.s32 0, %v26
    %v28 = vrot.slane %v23, %v27
    %v34 = vunpack.c.l.b16 %v19
    %v35 = vunpack.c.l.b16 %v20
    %v36 = vunpack.c.l.b16 %v21
    %v37 = vunpack.c.l.b16 %v22
    %v38 = vpack.c.b16 %v35, %v34
    %v39 = vpack.c.b16 %v37, %v36
    %vm42 = vcmask 261120
    %v44 = vsel %vm42, %v18, 0
    %46 = vmatprep.subr.bf16.mxu0 0
    %47 = vmatpush1.bf16.msra.mxu0 %v38
    %48 = vmatprep.subr.bf16.mxu0 0
    %49 = vmatpush1.bf16.msra.mxu0 %v39
    %50 = vmatprep.subr.bf16.mxu0 0
    %51 = vmatpush1.bf16.msra.mxu0 0
    %52 = vmatprep.subr.bf16.mxu0 0
    %53 = vmatpush1.bf16.msra.mxu0 0
    %54 = vmatprep.subr.bf16.mxu0 0
    %55 = vmatpush1.bf16.msra.mxu0 0
    %56 = vmatprep.subr.bf16.mxu0 0
    %57 = vmatpush1.bf16.msra.mxu0 0
    %58 = vmatprep.subr.bf16.mxu0 0
    %59 = vmatpush1.bf16.msra.mxu0 0
    %60 = vmatprep.subr.bf16.mxu0 0
    %61 = vmatpush1.bf16.msra.mxu0 0
    %62 = vmatprep.subr.bf16.mxu0 0
    %63 = vmatpush1.bf16.msra.mxu0 0
    %64 = vmatprep.subr.bf16.mxu0 0
    %65 = vmatpush1.bf16.msra.mxu0 0
    %66 = vmatprep.subr.bf16.mxu0 0
    %67 = vmatpush1.bf16.msra.mxu0 0
    %68 = vmatprep.subr.bf16.mxu0 0
    %69 = vmatpush1.bf16.msra.mxu0 0
    %70 = vmatprep.subr.bf16.mxu0 0
    %71 = vmatpush1.bf16.msra.mxu0 0
    %72 = vmatprep.subr.bf16.mxu0 0
    %73 = vmatpush1.bf16.msra.mxu0 0
    %74 = vmatprep.subr.bf16.mxu0 0
    %75 = vmatpush1.bf16.msra.mxu0 0
    %76 = vmatprep.subr.bf16.mxu0 0
    %77 = vmatpush1.bf16.msra.mxu0 0
    %78 = vmatprep.mubr.bf16.mxu0 0
    %79 = vmatmul.mubr.bf16.gmra.mrb[0].mxu0 %v44
    %v80 = vpop.f32.mrb[0].mxu0
    %v81 = vadd.f32 %v28, %v80
    %v82 = vpop.f32.mrb[0].mxu0
    %v83 = vpop.f32.mrb[0].mxu0
    %v84 = vadd.f32 %v28, %v83
    %v85 = vpop.f32.mrb[0].mxu0
    %86 = vdwg.mxu0
    %v87 = vmax.f32 %v81, 0.0
    %v88 = vmax.f32 %v84, 0.0
    %vm89 = vcmask 130048
    %90 = vst.msk [vmem:[#allocation2] sm:$0xff] %vm89, %v87
    %91 = vst.msk [vmem:[#allocation2 + $0x8] sm:$0xff] %vm89, %v88
    // Predicated region
    $region14: #{tpu_custom_call.1} parent=1 // pred_check
      _
    $region15: #{tpu_custom_call.1} parent=1 // pred_check_branch
      %93 = sbr.rel (0) target = $region17
    $region16: #{tpu_custom_call.1} parent=1 // pred_region
      %s95 = ssub.s32 256, 256
      %96 = vsyncadd [#allocation3], %s95
      %s97 = sshll.u32 [#allocation2], 4
      %s98 = int_to_ptr.vmem [resolvable:$true] %s97
      %103 = dma.vmem_to_hbm [thread:$0]  %s98, 256, %s3, [#allocation3], 128, 128, 8
    $region17: #{tpu_custom_call.1} parent=1 // pred_fallthru
      _
    // Predicated region
    $region18: #{tpu_custom_call.1} parent=1 // pred_check
      _
    $region19: #{tpu_custom_call.1} parent=1 // pred_check_branch
      %105 = sbr.rel (0) target = $region21
    $region20: #{tpu_custom_call.1} parent=1 // pred_region
      %106 = dma.done [#allocation3], 256
    $region21: #{tpu_custom_call.1} parent=1 // pred_fallthru
      _
    %107 = vsyncpa [#allocation3], 1

</llo_original>
